<compile_context>
chip_gen: v6e
topology: v6e:2x2x1
jax: 0.10.0
libtpu: 0.0.40
codegen_flags: <defaults>
</compile_context>

<pallas_src>
import functools

import jax
import jax.numpy as jnp
from jax import lax
from jax.experimental import pallas as pl
from jax.experimental.pallas import tpu as pltpu


def _mha_kernel(x_ref, wqkv_ref, bqkv_ref, wproj_ref, bproj_ref, o_ref,
                qkv_ref, ctx_ref, *, num_heads, head_dim):
    """One grid step == one batch element (all heads)."""
    C = num_heads * head_dim

    x = x_ref[0]                                                 # (N, C) bf16

    # Fused qkv projection: full contraction depth C, 3C-wide output.
    # (scale is already folded into the q columns / q bias on the host)
    qkv = jnp.dot(x, wqkv_ref[...], preferred_element_type=jnp.float32)
    qkv_ref[...] = (qkv + bqkv_ref[...]).astype(jnp.bfloat16)    # (N, 3C) bf16

    # Static loop over heads; all slices below are static (free views).
    for h in range(num_heads):
        lo, hi = h * head_dim, (h + 1) * head_dim
        q = qkv_ref[:, lo:hi]                                    # (N, hd) bf16
        k = qkv_ref[:, C + lo:C + hi]                            # (N, hd) bf16
        v = qkv_ref[:, 2 * C + lo:2 * C + hi]                    # (N, hd) bf16

        # Scores: contract on the last dim of both operands (no explicit k.T).
        s = lax.dot_general(q, k,
                            dimension_numbers=(((1,), (1,)), ((), ())),
                            preferred_element_type=jnp.float32)  # (N, N) f32

        # Softmax in f32; division replaced by EUP approximate reciprocal.
        s = s - jnp.max(s, axis=-1, keepdims=True)
        p = jnp.exp(s)
        p = p * pl.reciprocal(jnp.sum(p, axis=-1, keepdims=True), approx=True)

        # P @ V -> this head's context, parked in its output-column slot.
        ctx = jnp.dot(p.astype(jnp.bfloat16), v,
                      preferred_element_type=jnp.float32)        # (N, hd) f32
        ctx_ref[:, lo:hi] = ctx.astype(jnp.bfloat16)

    # Single full-depth output projection over all heads at once.
    out = jnp.dot(ctx_ref[...], wproj_ref[...],
                  preferred_element_type=jnp.float32)            # (N, C) f32
    o_ref[0] = (out + bproj_ref[...]).astype(o_ref.dtype)


def attention_block(x, wqkv, bqkv, wproj, bproj, *, num_heads):
    """Multi-head self attention matching AttentionBlock.forward.

    x:     (B, N, C) float32
    wqkv:  (C, 3C)   == torch qkv.weight.T  (columns ordered [q | k | v], head-major)
    bqkv:  (3C,)     == torch qkv.bias
    wproj: (C, C)    == torch proj.weight.T
    bproj: (C,)      == torch proj.bias
    """
    B, N, C = x.shape
    H = num_heads
    hd = C // H
    scale = float(hd) ** -0.5

    # ---- host-side (free) prep: fold scale into q weight/bias, bf16 casts ----
    wqkv_s = wqkv.at[:, :C].multiply(scale).astype(jnp.bfloat16)        # (C, 3C)
    bqkv_s = bqkv.at[:C].multiply(scale).reshape(1, 3 * C).astype(jnp.float32)
    wproj_b = wproj.astype(jnp.bfloat16)                                # (C, C)
    bproj_2d = bproj.reshape(1, C).astype(jnp.float32)                  # (1, C)
    x_bf = x.astype(jnp.bfloat16)                                       # (B, N, C)

    kernel = functools.partial(_mha_kernel, num_heads=H, head_dim=hd)

    # Advisory cost so XLA schedules the custom call sensibly.
    flops = 2 * B * (3 * N * C * C + 2 * N * N * C + N * C * C)
    bytes_accessed = (B * N * C * 2                 # x in (bf16)
                      + B * N * C * 4               # out (f32)
                      + 4 * C * C * 2               # resident bf16 weights (once)
                      + 4 * C * 4)                  # biases
    cost = pl.CostEstimate(flops=flops,
                           transcendentals=B * H * N * N,
                           bytes_accessed=bytes_accessed)

    # Per-step VMEM footprint: double-buffered x/out tiles, resident bf16
    # weights (counted double-buffered for safety), qkv/ctx bf16 scratch, and
    # f32 score/softmax intermediates.  Budget derived from the chip's actual
    # VMEM capacity (v7x = 64 MiB/core) rather than a hard-coded cap.
    step_bytes = (2 * N * C * 2                     # x tiles (bf16, x2)
                  + 2 * N * C * 4                   # out tiles (f32, x2)
                  + 2 * 4 * C * C * 2               # wqkv + wproj (bf16, x2)
                  + N * 3 * C * 2 + N * C * 2       # qkv + ctx scratch (bf16)
                  + N * 3 * C * 4                   # f32 qkv temp
                  + 2 * N * N * 4)                  # score / softmax tiles
    try:
        vmem_cap = pltpu.get_tpu_info().vmem_capacity_bytes
    except Exception:  # pragma: no cover - conservative fallback
        vmem_cap = 64 * 1024 * 1024
    vmem_limit = int(min(max(2 * step_bytes, 16 * 1024 * 1024),
                         (3 * vmem_cap) // 4))

    return pl.pallas_call(
        kernel,
        out_shape=jax.ShapeDtypeStruct((B, N, C), x.dtype),
        grid=(B,),
        in_specs=[
            pl.BlockSpec((1, N, C), lambda b: (b, 0, 0)),     # x (per batch), bf16
            pl.BlockSpec((C, 3 * C), lambda b: (0, 0)),       # fused qkv weight (resident)
            pl.BlockSpec((1, 3 * C), lambda b: (0, 0)),       # fused qkv bias  (resident)
            pl.BlockSpec((C, C), lambda b: (0, 0)),           # proj weight     (resident)
            pl.BlockSpec((1, C), lambda b: (0, 0)),           # proj bias       (resident)
        ],
        out_specs=pl.BlockSpec((1, N, C), lambda b: (b, 0, 0)),
        scratch_shapes=[
            pltpu.VMEM((N, 3 * C), jnp.bfloat16),             # staged qkv
            pltpu.VMEM((N, C), jnp.bfloat16),                 # merged head contexts
        ],
        compiler_params=pltpu.CompilerParams(
            dimension_semantics=("parallel",),
            vmem_limit_bytes=vmem_limit),
        cost_estimate=cost,
    )(x_bf, wqkv_s, bqkv_s, wproj_b, bproj_2d)


def _xavier_uniform(key, fan_in, fan_out, shape):
    bound = (6.0 / (fan_in + fan_out)) ** 0.5
    return jax.random.uniform(key, shape, jnp.float32, minval=-bound, maxval=bound)


def _reference(x, wqkv, bqkv, wproj, bproj, num_heads):
    """Pure-JAX f32 reference mirroring the PyTorch forward."""
    B, N, C = x.shape
    hd = C // num_heads
    scale = hd ** (-0.5)
    qkv = x @ wqkv + bqkv                                        # (B, N, 3C)
    qkv = qkv.reshape(B, N, 3, num_heads, hd).transpose(2, 0, 3, 1, 4)
    q, k, v = qkv[0], qkv[1], qkv[2]                             # (B, H, N, hd)
    attn = jnp.einsum("bhnd,bhmd->bhnm", q, k) * scale
    attn = jax.nn.softmax(attn, axis=-1)
    out = jnp.einsum("bhnm,bhmd->bhnd", attn, v)                 # (B, H, N, hd)
    out = out.transpose(0, 2, 1, 3).reshape(B, N, C)
    return out @ wproj + bproj


if __name__ == "__main__":
    # Small shapes consistent with the module's forward: (B, N, C)
    B, N, C = 2, 8, 32
    num_heads = 4

    root = jax.random.PRNGKey(0)
    kx, kw1, kb1, kw2, kb2 = jax.random.split(root, 5)

    x = jax.random.normal(kx, (B, N, C), jnp.float32)

    # torch Linear(embed_dim, 3*embed_dim): weight (3C, C), xavier_uniform.
    # We store the transpose (C, 3C) so the math is x @ W + b.
    wqkv = _xavier_uniform(kw1, fan_in=C, fan_out=3 * C, shape=(C, 3 * C))
    bqkv = 1e-6 * jax.random.normal(kb1, (3 * C,), jnp.float32)
    wproj = _xavier_uniform(kw2, fan_in=C, fan_out=C, shape=(C, C))
    bproj = 1e-6 * jax.random.normal(kb2, (C,), jnp.float32)

    out = attention_block(x, wqkv, bqkv, wproj, bproj, num_heads=num_heads)
    out = jax.block_until_ready(out)

    ref = _reference(x, wqkv, bqkv, wproj, bproj, num_heads)
    assert out.shape == (B, N, C)
    # bf16 matmul operands + approximate reciprocal => modest tolerance vs f32 ref.
    assert jnp.allclose(out, ref, atol=3e-2, rtol=3e-2), "mismatch vs reference"

    print("KERNEL_OK")
</pallas_src>

<mosaic_0001>
module attributes {stable_mosaic.version = 11 : i64} {
  func.func @_mha_kernel(%arg0: i32, %arg1: memref<1x8x32xbf16, #tpu.memory_space<vmem>>, %arg2: memref<32x96xbf16, #tpu.memory_space<vmem>>, %arg3: memref<1x96xf32, #tpu.memory_space<vmem>>, %arg4: memref<32x32xbf16, #tpu.memory_space<vmem>>, %arg5: memref<1x32xf32, #tpu.memory_space<vmem>>, %arg6: memref<1x8x32xf32, #tpu.memory_space<vmem>>, %arg7: memref<8x96xbf16, #tpu.memory_space<vmem>>, %arg8: memref<8x32xbf16, #tpu.memory_space<vmem>>) attributes {dimension_semantics = [#tpu.dimension_semantics<parallel>], iteration_bounds = array<i64: 2>, scalar_prefetch = 0 : i64, scratch_operands = 2 : i64, tpu.core_type = #tpu.core_type<tc>, window_params = [{transform_indices = @transform_0, window_bounds = array<i64: 1, 8, 32>}, {pipeline_mode = #tpu.pipeline_mode<synchronous>, transform_indices = @transform_1, window_bounds = array<i64: 32, 96>}, {pipeline_mode = #tpu.pipeline_mode<synchronous>, transform_indices = @transform_2, window_bounds = array<i64: 1, 96>}, {pipeline_mode = #tpu.pipeline_mode<synchronous>, transform_indices = @transform_3, window_bounds = array<i64: 32, 32>}, {pipeline_mode = #tpu.pipeline_mode<synchronous>, transform_indices = @transform_4, window_bounds = array<i64: 1, 32>}, {transform_indices = @transform_5, window_bounds = array<i64: 1, 8, 32>}]} {
    %c0 = arith.constant 0 : index
    %c0_0 = arith.constant 0 : index
    %c0_1 = arith.constant 0 : index
    %0 = vector.load %arg1[%c0, %c0_0, %c0_1] : memref<1x8x32xbf16, #tpu.memory_space<vmem>>, vector<1x8x32xbf16>
    %1 = vector.shape_cast %0 : vector<1x8x32xbf16> to vector<8x32xbf16>
    %c0_2 = arith.constant 0 : index
    %c0_3 = arith.constant 0 : index
    %2 = vector.load %arg2[%c0_2, %c0_3] : memref<32x96xbf16, #tpu.memory_space<vmem>>, vector<32x96xbf16>
    %cst = arith.constant dense<0.000000e+00> : vector<8x96xf32>
    %3 = tpu.matmul %1, %2, %cst {dimension_numbers = #tpu.dot_dimension_numbers<[1], [0], [0], [1], [0, 0, 1, 1], [], []>} : vector<8x32xbf16>, vector<32x96xbf16>, vector<8x96xf32> -> vector<8x96xf32>
    %c0_4 = arith.constant 0 : index
    %c0_5 = arith.constant 0 : index
    %4 = vector.load %arg3[%c0_4, %c0_5] : memref<1x96xf32, #tpu.memory_space<vmem>>, vector<1x96xf32>
    %5 = vector.broadcast %4 : vector<1x96xf32> to vector<8x96xf32>
    %6 = arith.addf %3, %5 : vector<8x96xf32>
    %7 = arith.truncf %6 : vector<8x96xf32> to vector<8x96xbf16>
    %c0_6 = arith.constant 0 : index
    %c0_7 = arith.constant 0 : index
    %8 = vector.load %arg7[%c0_6, %c0_7] : memref<8x96xbf16, #tpu.memory_space<vmem>>, vector<8x96xbf16>
    tpu.vector_store %arg7[%c0_6, %c0_7], %7 {strides = array<i32>} : memref<8x96xbf16, #tpu.memory_space<vmem>>, vector<8x96xbf16>,
    %c0_8 = arith.constant 0 : index
    %c0_9 = arith.constant 0 : index
    %9 = vector.load %arg7[%c0_8, %c0_9] : memref<8x96xbf16, #tpu.memory_space<vmem>>, vector<8x8xbf16>
    %c0_10 = arith.constant 0 : index
    %c32 = arith.constant 32 : index
    %10 = vector.load %arg7[%c0_10, %c32] : memref<8x96xbf16, #tpu.memory_space<vmem>>, vector<8x8xbf16>
    %c0_11 = arith.constant 0 : index
    %c64 = arith.constant 64 : index
    %11 = vector.load %arg7[%c0_11, %c64] : memref<8x96xbf16, #tpu.memory_space<vmem>>, vector<8x8xbf16>
    %cst_12 = arith.constant dense<0.000000e+00> : vector<8x8xf32>
    %12 = tpu.matmul %9, %10, %cst_12 {dimension_numbers = #tpu.dot_dimension_numbers<[1], [1], [0], [0], [0, 0, 1, 0], [], []>} : vector<8x8xbf16>, vector<8x8xbf16>, vector<8x8xf32> -> vector<8x8xf32>
    %cst_13 = arith.constant dense<0xFF800000> : vector<8xf32>
    %13 = vector.multi_reduction <maximumf>, %12, %cst_13 [1] : vector<8x8xf32> to vector<8xf32>
    %14 = vector.shape_cast %13 : vector<8xf32> to vector<8x1xf32>
    %15 = vector.broadcast %14 : vector<8x1xf32> to vector<8x8xf32>
    %16 = arith.subf %12, %15 : vector<8x8xf32>
    %17 = math.exp %16 : vector<8x8xf32>
    %cst_14 = arith.constant dense<0.000000e+00> : vector<8xf32>
    %18 = vector.multi_reduction <add>, %17, %cst_14 [1] : vector<8x8xf32> to vector<8xf32>
    %19 = vector.shape_cast %18 : vector<8xf32> to vector<8x1xf32>
    %20 = tpu.reciprocal %19 {approx = true} : vector<8x1xf32> -> vector<8x1xf32>
    %21 = vector.broadcast %20 : vector<8x1xf32> to vector<8x8xf32>
    %22 = arith.mulf %17, %21 : vector<8x8xf32>
    %23 = arith.truncf %22 : vector<8x8xf32> to vector<8x8xbf16>
    %cst_15 = arith.constant dense<0.000000e+00> : vector<8x8xf32>
    %24 = tpu.matmul %23, %11, %cst_15 {dimension_numbers = #tpu.dot_dimension_numbers<[1], [0], [0], [1], [0, 0, 1, 1], [], []>} : vector<8x8xbf16>, vector<8x8xbf16>, vector<8x8xf32> -> vector<8x8xf32>
    %25 = arith.truncf %24 : vector<8x8xf32> to vector<8x8xbf16>
    %c0_16 = arith.constant 0 : index
    %c0_17 = arith.constant 0 : index
    %26 = vector.load %arg8[%c0_16, %c0_17] : memref<8x32xbf16, #tpu.memory_space<vmem>>, vector<8x8xbf16>
    tpu.vector_store %arg8[%c0_16, %c0_17], %25 {strides = array<i32>} : memref<8x32xbf16, #tpu.memory_space<vmem>>, vector<8x8xbf16>,
    %c0_18 = arith.constant 0 : index
    %c8 = arith.constant 8 : index
    %27 = vector.load %arg7[%c0_18, %c8] : memref<8x96xbf16, #tpu.memory_space<vmem>>, vector<8x8xbf16>
    %c0_19 = arith.constant 0 : index
    %c40 = arith.constant 40 : index
    %28 = vector.load %arg7[%c0_19, %c40] : memref<8x96xbf16, #tpu.memory_space<vmem>>, vector<8x8xbf16>
    %c0_20 = arith.constant 0 : index
    %c72 = arith.constant 72 : index
    %29 = vector.load %arg7[%c0_20, %c72] : memref<8x96xbf16, #tpu.memory_space<vmem>>, vector<8x8xbf16>
    %cst_21 = arith.constant dense<0.000000e+00> : vector<8x8xf32>
    %30 = tpu.matmul %27, %28, %cst_21 {dimension_numbers = #tpu.dot_dimension_numbers<[1], [1], [0], [0], [0, 0, 1, 0], [], []>} : vector<8x8xbf16>, vector<8x8xbf16>, vector<8x8xf32> -> vector<8x8xf32>
    %cst_22 = arith.constant dense<0xFF800000> : vector<8xf32>
    %31 = vector.multi_reduction <maximumf>, %30, %cst_22 [1] : vector<8x8xf32> to vector<8xf32>
    %32 = vector.shape_cast %31 : vector<8xf32> to vector<8x1xf32>
    %33 = vector.broadcast %32 : vector<8x1xf32> to vector<8x8xf32>
    %34 = arith.subf %30, %33 : vector<8x8xf32>
    %35 = math.exp %34 : vector<8x8xf32>
    %cst_23 = arith.constant dense<0.000000e+00> : vector<8xf32>
    %36 = vector.multi_reduction <add>, %35, %cst_23 [1] : vector<8x8xf32> to vector<8xf32>
    %37 = vector.shape_cast %36 : vector<8xf32> to vector<8x1xf32>
    %38 = tpu.reciprocal %37 {approx = true} : vector<8x1xf32> -> vector<8x1xf32>
    %39 = vector.broadcast %38 : vector<8x1xf32> to vector<8x8xf32>
    %40 = arith.mulf %35, %39 : vector<8x8xf32>
    %41 = arith.truncf %40 : vector<8x8xf32> to vector<8x8xbf16>
    %cst_24 = arith.constant dense<0.000000e+00> : vector<8x8xf32>
    %42 = tpu.matmul %41, %29, %cst_24 {dimension_numbers = #tpu.dot_dimension_numbers<[1], [0], [0], [1], [0, 0, 1, 1], [], []>} : vector<8x8xbf16>, vector<8x8xbf16>, vector<8x8xf32> -> vector<8x8xf32>
    %43 = arith.truncf %42 : vector<8x8xf32> to vector<8x8xbf16>
    %c0_25 = arith.constant 0 : index
    %c8_26 = arith.constant 8 : index
    %44 = vector.load %arg8[%c0_25, %c8_26] : memref<8x32xbf16, #tpu.memory_space<vmem>>, vector<8x8xbf16>
    tpu.vector_store %arg8[%c0_25, %c8_26], %43 {strides = array<i32>} : memref<8x32xbf16, #tpu.memory_space<vmem>>, vector<8x8xbf16>,
    %c0_27 = arith.constant 0 : index
    %c16 = arith.constant 16 : index
    %45 = vector.load %arg7[%c0_27, %c16] : memref<8x96xbf16, #tpu.memory_space<vmem>>, vector<8x8xbf16>
    %c0_28 = arith.constant 0 : index
    %c48 = arith.constant 48 : index
    %46 = vector.load %arg7[%c0_28, %c48] : memref<8x96xbf16, #tpu.memory_space<vmem>>, vector<8x8xbf16>
    %c0_29 = arith.constant 0 : index
    %c80 = arith.constant 80 : index
    %47 = vector.load %arg7[%c0_29, %c80] : memref<8x96xbf16, #tpu.memory_space<vmem>>, vector<8x8xbf16>
    %cst_30 = arith.constant dense<0.000000e+00> : vector<8x8xf32>
    %48 = tpu.matmul %45, %46, %cst_30 {dimension_numbers = #tpu.dot_dimension_numbers<[1], [1], [0], [0], [0, 0, 1, 0], [], []>} : vector<8x8xbf16>, vector<8x8xbf16>, vector<8x8xf32> -> vector<8x8xf32>
    %cst_31 = arith.constant dense<0xFF800000> : vector<8xf32>
    %49 = vector.multi_reduction <maximumf>, %48, %cst_31 [1] : vector<8x8xf32> to vector<8xf32>
    %50 = vector.shape_cast %49 : vector<8xf32> to vector<8x1xf32>
    %51 = vector.broadcast %50 : vector<8x1xf32> to vector<8x8xf32>
    %52 = arith.subf %48, %51 : vector<8x8xf32>
    %53 = math.exp %52 : vector<8x8xf32>
    %cst_32 = arith.constant dense<0.000000e+00> : vector<8xf32>
    %54 = vector.multi_reduction <add>, %53, %cst_32 [1] : vector<8x8xf32> to vector<8xf32>
    %55 = vector.shape_cast %54 : vector<8xf32> to vector<8x1xf32>
    %56 = tpu.reciprocal %55 {approx = true} : vector<8x1xf32> -> vector<8x1xf32>
    %57 = vector.broadcast %56 : vector<8x1xf32> to vector<8x8xf32>
    %58 = arith.mulf %53, %57 : vector<8x8xf32>
    %59 = arith.truncf %58 : vector<8x8xf32> to vector<8x8xbf16>
    %cst_33 = arith.constant dense<0.000000e+00> : vector<8x8xf32>
    %60 = tpu.matmul %59, %47, %cst_33 {dimension_numbers = #tpu.dot_dimension_numbers<[1], [0], [0], [1], [0, 0, 1, 1], [], []>} : vector<8x8xbf16>, vector<8x8xbf16>, vector<8x8xf32> -> vector<8x8xf32>
    %61 = arith.truncf %60 : vector<8x8xf32> to vector<8x8xbf16>
    %c0_34 = arith.constant 0 : index
    %c16_35 = arith.constant 16 : index
    %62 = vector.load %arg8[%c0_34, %c16_35] : memref<8x32xbf16, #tpu.memory_space<vmem>>, vector<8x8xbf16>
    tpu.vector_store %arg8[%c0_34, %c16_35], %61 {strides = array<i32>} : memref<8x32xbf16, #tpu.memory_space<vmem>>, vector<8x8xbf16>,
    %c0_36 = arith.constant 0 : index
    %c24 = arith.constant 24 : index
    %63 = vector.load %arg7[%c0_36, %c24] : memref<8x96xbf16, #tpu.memory_space<vmem>>, vector<8x8xbf16>
    %c0_37 = arith.constant 0 : index
    %c56 = arith.constant 56 : index
    %64 = vector.load %arg7[%c0_37, %c56] : memref<8x96xbf16, #tpu.memory_space<vmem>>, vector<8x8xbf16>
    %c0_38 = arith.constant 0 : index
    %c88 = arith.constant 88 : index
    %65 = vector.load %arg7[%c0_38, %c88] : memref<8x96xbf16, #tpu.memory_space<vmem>>, vector<8x8xbf16>
    %cst_39 = arith.constant dense<0.000000e+00> : vector<8x8xf32>
    %66 = tpu.matmul %63, %64, %cst_39 {dimension_numbers = #tpu.dot_dimension_numbers<[1], [1], [0], [0], [0, 0, 1, 0], [], []>} : vector<8x8xbf16>, vector<8x8xbf16>, vector<8x8xf32> -> vector<8x8xf32>
    %cst_40 = arith.constant dense<0xFF800000> : vector<8xf32>
    %67 = vector.multi_reduction <maximumf>, %66, %cst_40 [1] : vector<8x8xf32> to vector<8xf32>
    %68 = vector.shape_cast %67 : vector<8xf32> to vector<8x1xf32>
    %69 = vector.broadcast %68 : vector<8x1xf32> to vector<8x8xf32>
    %70 = arith.subf %66, %69 : vector<8x8xf32>
    %71 = math.exp %70 : vector<8x8xf32>
    %cst_41 = arith.constant dense<0.000000e+00> : vector<8xf32>
    %72 = vector.multi_reduction <add>, %71, %cst_41 [1] : vector<8x8xf32> to vector<8xf32>
    %73 = vector.shape_cast %72 : vector<8xf32> to vector<8x1xf32>
    %74 = tpu.reciprocal %73 {approx = true} : vector<8x1xf32> -> vector<8x1xf32>
    %75 = vector.broadcast %74 : vector<8x1xf32> to vector<8x8xf32>
    %76 = arith.mulf %71, %75 : vector<8x8xf32>
    %77 = arith.truncf %76 : vector<8x8xf32> to vector<8x8xbf16>
    %cst_42 = arith.constant dense<0.000000e+00> : vector<8x8xf32>
    %78 = tpu.matmul %77, %65, %cst_42 {dimension_numbers = #tpu.dot_dimension_numbers<[1], [0], [0], [1], [0, 0, 1, 1], [], []>} : vector<8x8xbf16>, vector<8x8xbf16>, vector<8x8xf32> -> vector<8x8xf32>
    %79 = arith.truncf %78 : vector<8x8xf32> to vector<8x8xbf16>
    %c0_43 = arith.constant 0 : index
    %c24_44 = arith.constant 24 : index
    %80 = vector.load %arg8[%c0_43, %c24_44] : memref<8x32xbf16, #tpu.memory_space<vmem>>, vector<8x8xbf16>
    tpu.vector_store %arg8[%c0_43, %c24_44], %79 {strides = array<i32>} : memref<8x32xbf16, #tpu.memory_space<vmem>>, vector<8x8xbf16>,
    %c0_45 = arith.constant 0 : index
    %c0_46 = arith.constant 0 : index
    %81 = vector.load %arg8[%c0_45, %c0_46] : memref<8x32xbf16, #tpu.memory_space<vmem>>, vector<8x32xbf16>
    %c0_47 = arith.constant 0 : index
    %c0_48 = arith.constant 0 : index
    %82 = vector.load %arg4[%c0_47, %c0_48] : memref<32x32xbf16, #tpu.memory_space<vmem>>, vector<32x32xbf16>
    %cst_49 = arith.constant dense<0.000000e+00> : vector<8x32xf32>
    %83 = tpu.matmul %81, %82, %cst_49 {dimension_numbers = #tpu.dot_dimension_numbers<[1], [0], [0], [1], [0, 0, 1, 1], [], []>} : vector<8x32xbf16>, vector<32x32xbf16>, vector<8x32xf32> -> vector<8x32xf32>
    %c0_50 = arith.constant 0 : index
    %c0_51 = arith.constant 0 : index
    %84 = vector.load %arg5[%c0_50, %c0_51] : memref<1x32xf32, #tpu.memory_space<vmem>>, vector<1x32xf32>
    %85 = vector.broadcast %84 : vector<1x32xf32> to vector<8x32xf32>
    %86 = arith.addf %83, %85 : vector<8x32xf32>
    %c0_52 = arith.constant 0 : index
    %c0_53 = arith.constant 0 : index
    %c0_54 = arith.constant 0 : index
    %87 = vector.load %arg6[%c0_52, %c0_53, %c0_54] : memref<1x8x32xf32, #tpu.memory_space<vmem>>, vector<1x8x32xf32>
    %88 = vector.shape_cast %87 : vector<1x8x32xf32> to vector<8x32xf32>
    %89 = vector.shape_cast %86 : vector<8x32xf32> to vector<1x8x32xf32>
    tpu.vector_store %arg6[%c0_52, %c0_53, %c0_54], %89 {strides = array<i32>} : memref<1x8x32xf32, #tpu.memory_space<vmem>>, vector<1x8x32xf32>,
    return
  }
  func.func @transform_0(%arg0: i32) -> (i32, i32, i32) {
    %c0_i32 = arith.constant 0 : i32
    %c0_i32_0 = arith.constant 0 : i32
    %c0_i32_1 = arith.constant 0 : i32
    return %arg0, %c0_i32, %c0_i32_0 : i32, i32, i32
  }
  func.func @transform_1(%arg0: i32) -> (i32, i32) {
    %c0_i32 = arith.constant 0 : i32
    %c0_i32_0 = arith.constant 0 : i32
    %c0_i32_1 = arith.constant 0 : i32
    return %c0_i32, %c0_i32_0 : i32, i32
  }
  func.func @transform_2(%arg0: i32) -> (i32, i32) {
    %c0_i32 = arith.constant 0 : i32
    %c0_i32_0 = arith.constant 0 : i32
    %c0_i32_1 = arith.constant 0 : i32
    return %c0_i32, %c0_i32_0 : i32, i32
  }
  func.func @transform_3(%arg0: i32) -> (i32, i32) {
    %c0_i32 = arith.constant 0 : i32
    %c0_i32_0 = arith.constant 0 : i32
    %c0_i32_1 = arith.constant 0 : i32
    return %c0_i32, %c0_i32_0 : i32, i32
  }
  func.func @transform_4(%arg0: i32) -> (i32, i32) {
    %c0_i32 = arith.constant 0 : i32
    %c0_i32_0 = arith.constant 0 : i32
    %c0_i32_1 = arith.constant 0 : i32
    return %c0_i32, %c0_i32_0 : i32, i32
  }
  func.func @transform_5(%arg0: i32) -> (i32, i32, i32) {
    %c0_i32 = arith.constant 0 : i32
    %c0_i32_0 = arith.constant 0 : i32
    %c0_i32_1 = arith.constant 0 : i32
    return %arg0, %c0_i32, %c0_i32_0 : i32, i32, i32
  }
}

</mosaic_0001>

<llo_original>
// kernel: tpu_custom_call.1
$region0: #{tpu_custom_call.1}
  #allocation0 [shape = 'u32[]', space=smem, size = 0x4, offset = 0x4, fixed_abs, tag = 'smem constant byte address 0x4 - core index']
  #allocation1 [shape = 'u32[144,128]{1,0:T(1,128)}', space=vmem, size = 0x12000, scoped, tag = 'internal scratch']
  #allocation2 [shape = 'bf16[8,96]{1,0:T(8,128)(2,1)}', space=vmem, size = 0x800, scoped, tag = 'scratch operand']
  #allocation3 [shape = 'bf16[8,32]{1,0:T(8,128)(2,1)}', space=vmem, size = 0x800, scoped, tag = 'scratch operand']
  %s0 = inlined_call_operand.hbm [shape: bf16[2,8,32], index: 0, kind: input, shape index: {}]
  %s1 = inlined_call_operand.hbm [shape: bf16[32,96], index: 1, kind: input, shape index: {}]
  %s2 = inlined_call_operand.vmem [shape: f32[1,96], index: 2, kind: input, shape index: {}]
  %s3 = inlined_call_operand.hbm [shape: bf16[32,32], index: 3, kind: input, shape index: {}]
  %s4 = inlined_call_operand.vmem [shape: f32[1,32], index: 4, kind: input, shape index: {}]
  %s5 = inlined_call_operand.hbm [shape: f32[2,8,32], index: 5, kind: output, shape index: {}]
  %s6 = sld [smem:[#allocation0]]
  $region65: #{tpu_custom_call.1} parent=0
    _
  %s8 = ssub.s32 1, %s6
  %s9 = scalar_select 0, %s8, %s6
  $region1: #{tpu_custom_call.1} parent=0
    #allocation4 [shape = 'u8[4096]{0}', space=vmem, size = 0x1000, scoped, tag = 'input window, operand 0']
    #allocation5 [shape = 's32[2]{0}', space=sflag, size = 0x8, scoped, tag = 'scoped memory for tpu_custom_call.1']
    #allocation6 [shape = 's32[2]{0}', space=sflag, size = 0x8, scoped, tag = 'scoped memory for tpu_custom_call.1']
    #allocation7 [shape = 'u8[8192]{0}', space=vmem, size = 0x2000, scoped, tag = 'input window, operand 1, single buffered']
    #allocation8 [shape = 's32[1]{0}', space=sflag, size = 0x4, scoped, tag = 'scoped memory for tpu_custom_call.1']
    #allocation9 [shape = 'u8[8192]{0}', space=vmem, size = 0x2000, scoped, tag = 'input window, operand 3, single buffered']
    #allocation10 [shape = 'u8[8192]{0}', space=vmem, size = 0x2000, scoped, tag = 'output window, operand 0']
    %10 = vsyncpa [#allocation5], 0
    %s11 = scalar_lea.sflag [#allocation5], 1
    %12 = vsyncpa %s11, 0
    %13 = vsyncpa [#allocation8], 0
    %14 = vsyncpa [#allocation6], 0
    %s15 = scalar_lea.sflag [#allocation6], 1
    %16 = vsyncpa %s15, 0
    loop: start=0, step=1, limit=4
    $region2: #{tpu_custom_call.1} parent=1 // loop_pre_header
      _
    $region3: #{tpu_custom_call.1} parent=1 // loop_header
      %s18 = sphi 0, %s22
      %p19 = scmp.ge.s32.totalorder %s18, 4
      %s28 = sphi 0, %s30
      %s31 = sphi 0, %s28
      %s32 = sphi 0, %s31
      %s48 = sphi 0, %s32
      %s52 = sphi 0, %s52
      %s54 = sphi 0, %s52
      %s55 = sphi 0, %s54
      %s69 = sphi 0, %s55
      %s73 = sphi 0, %s73
      %s75 = sphi 0, %s73
      %s76 = sphi 0, %s75
      %s90 = sphi 0, %s76
      %s94 = sphi 0, %s94
      %s96 = sphi 0, %s94
      %s97 = sphi 0, %s96
      %s111 = sphi 0, %s97
      %s115 = sphi 0, %s115
      %s117 = sphi 0, %s115
      %s118 = sphi 0, %s117
      %s132 = sphi 0, %s118
      %s138 = sphi 0, %s140
      %s141 = sphi 0, %s138
      %s142 = sphi 0, %s141
      %s158 = sphi 0, %s142
    $region4: #{tpu_custom_call.1} parent=1 // loop_header_branch
      %21 = sbr.rel (%p19) target = $region8
    $region5: #{tpu_custom_call.1} parent=1 // loop_body
      %s23 = ssub.s32 %s18, 1
      %s24 = ssub.s32 %s18, 2
      %s25 = sadd.s32 %s18, 1
      %s26 = ssub.s32 %s18, %s25
      %p27 = scmp.eq.s32.totalorder %s26, 0
      %s29 = sadd.s32 %s28, 1
      %s30 = scalar_select %p27, %s28, %s29
      %p33 = pneg %p27
      %p34 = scmp.eq.s32.totalorder %s18, 1
      %p35 = por %p33, %p34
      %p36 = scmp.ne.s32.totalorder %s28, %s31
      %p37 = scmp.eq.s32.totalorder %s18, 0
      %p38 = por %p36, %p37
      %p39 = scmp.ne.s32.totalorder %s28, %s31
      %p40 = scmp.eq.s32.totalorder %s23, 1
      %p41 = por %p39, %p40
      %p42 = scmp.ne.s32.totalorder %s31, %s32
      %p43 = scmp.eq.s32.totalorder %s23, 0
      %p44 = por %p42, %p43
      %p45 = scmp.ne.s32.totalorder %s31, %s32
      %p46 = scmp.eq.s32.totalorder %s24, 1
      %p47 = por %p45, %p46
      %p49 = scmp.ne.s32.totalorder %s32, %s48
      %p50 = scmp.eq.s32.totalorder %s24, 0
      %p51 = por %p49, %p50
      %s53 = sadd.s32 %s52, 1
      %p56 = scmp.eq.s32.totalorder %s18, 1
      %p57 = scmp.ne.s32.totalorder %s52, %s54
      %p58 = scmp.eq.s32.totalorder %s18, 0
      %p59 = por %p57, %p58
      %p60 = scmp.ne.s32.totalorder %s52, %s54
      %p61 = scmp.eq.s32.totalorder %s23, 1
      %p62 = por %p60, %p61
      %p63 = scmp.ne.s32.totalorder %s54, %s55
      %p64 = scmp.eq.s32.totalorder %s23, 0
      %p65 = por %p63, %p64
      %p66 = scmp.ne.s32.totalorder %s54, %s55
      %p67 = scmp.eq.s32.totalorder %s24, 1
      %p68 = por %p66, %p67
      %p70 = scmp.ne.s32.totalorder %s55, %s69
      %p71 = scmp.eq.s32.totalorder %s24, 0
      %p72 = por %p70, %p71
      %s74 = sadd.s32 %s73, 1
      %p77 = scmp.eq.s32.totalorder %s18, 1
      %p78 = scmp.ne.s32.totalorder %s73, %s75
      %p79 = scmp.eq.s32.totalorder %s18, 0
      %p80 = por %p78, %p79
      %p81 = scmp.ne.s32.totalorder %s73, %s75
      %p82 = scmp.eq.s32.totalorder %s23, 1
      %p83 = por %p81, %p82
      %p84 = scmp.ne.s32.totalorder %s75, %s76
      %p85 = scmp.eq.s32.totalorder %s23, 0
      %p86 = por %p84, %p85
      %p87 = scmp.ne.s32.totalorder %s75, %s76
      %p88 = scmp.eq.s32.totalorder %s24, 1
      %p89 = por %p87, %p88
      %p91 = scmp.ne.s32.totalorder %s76, %s90
      %p92 = scmp.eq.s32.totalorder %s24, 0
      %p93 = por %p91, %p92
      %s95 = sadd.s32 %s94, 1
      %p98 = scmp.eq.s32.totalorder %s18, 1
      %p99 = scmp.ne.s32.totalorder %s94, %s96
      %p100 = scmp.eq.s32.totalorder %s18, 0
      %p101 = por %p99, %p100
      %p102 = scmp.ne.s32.totalorder %s94, %s96
      %p103 = scmp.eq.s32.totalorder %s23, 1
      %p104 = por %p102, %p103
      %p105 = scmp.ne.s32.totalorder %s96, %s97
      %p106 = scmp.eq.s32.totalorder %s23, 0
      %p107 = por %p105, %p106
      %p108 = scmp.ne.s32.totalorder %s96, %s97
      %p109 = scmp.eq.s32.totalorder %s24, 1
      %p110 = por %p108, %p109
      %p112 = scmp.ne.s32.totalorder %s97, %s111
      %p113 = scmp.eq.s32.totalorder %s24, 0
      %p114 = por %p112, %p113
      %s116 = sadd.s32 %s115, 1
      %p119 = scmp.eq.s32.totalorder %s18, 1
      %p120 = scmp.ne.s32.totalorder %s115, %s117
      %p121 = scmp.eq.s32.totalorder %s18, 0
      %p122 = por %p120, %p121
      %p123 = scmp.ne.s32.totalorder %s115, %s117
      %p124 = scmp.eq.s32.totalorder %s23, 1
      %p125 = por %p123, %p124
      %p126 = scmp.ne.s32.totalorder %s117, %s118
      %p127 = scmp.eq.s32.totalorder %s23, 0
      %p128 = por %p126, %p127
      %p129 = scmp.ne.s32.totalorder %s117, %s118
      %p130 = scmp.eq.s32.totalorder %s24, 1
      %p131 = por %p129, %p130
      %p133 = scmp.ne.s32.totalorder %s118, %s132
      %p134 = scmp.eq.s32.totalorder %s24, 0
      %p135 = por %p133, %p134
      %s136 = ssub.s32 %s18, %s25
      %p137 = scmp.eq.s32.totalorder %s136, 0
      %s139 = sadd.s32 %s138, 1
      %s140 = scalar_select %p137, %s138, %s139
      %p143 = pneg %p137
      %p144 = scmp.eq.s32.totalorder %s18, 1
      %p145 = por %p143, %p144
      %p146 = scmp.ne.s32.totalorder %s138, %s141
      %p147 = scmp.eq.s32.totalorder %s18, 0
      %p148 = por %p146, %p147
      %p149 = scmp.ne.s32.totalorder %s138, %s141
      %p150 = scmp.eq.s32.totalorder %s23, 1
      %p151 = por %p149, %p150
      %p152 = scmp.ne.s32.totalorder %s141, %s142
      %p153 = scmp.eq.s32.totalorder %s23, 0
      %p154 = por %p152, %p153
      %p155 = scmp.ne.s32.totalorder %s141, %s142
      %p156 = scmp.eq.s32.totalorder %s24, 1
      %p157 = por %p155, %p156
      %p159 = scmp.ne.s32.totalorder %s142, %s158
      %p160 = scmp.eq.s32.totalorder %s24, 0
      %p161 = por %p159, %p160
      %p162 = scmp.le.s32.totalorder 1, %s18
      %p163 = scmp.lt.s32.totalorder %s18, 3
      %p164 = pnand %p162, %p163
      %p165 = pneg %p164
      // Predicated region
      $region9: #{tpu_custom_call.1} parent=5 // pred_check
        _
      $region10: #{tpu_custom_call.1} parent=5 // pred_check_branch
        %167 = sbr.rel (%p164) target = $region12
      $region11: #{tpu_custom_call.1} parent=5 // pred_region
        %s168 = ssub.s32 %s18, 1
        // Predicated region
        $region13: #{tpu_custom_call.1} parent=11 // pred_check
          %p169 = pneg %p65
        $region14: #{tpu_custom_call.1} parent=11 // pred_check_branch
          %171 = sbr.rel (%p169) target = $region16
        $region15: #{tpu_custom_call.1} parent=11 // pred_region
          %s173 = ssub.s32 256, 256
          %174 = vsyncadd [#allocation8], %s173
          %s175 = sshll.u32 [#allocation7], 4
          %s176 = int_to_ptr.vmem [resolvable:$true] %s175
          %181 = dma.hbm_to_vmem [thread:$0]  %s1, 256, %s176, [#allocation8], 64, 64, 4
        $region16: #{tpu_custom_call.1} parent=11 // pred_fallthru
          _
        // Predicated region
        $region17: #{tpu_custom_call.1} parent=11 // pred_check
          %p182 = pneg %p86
        $region18: #{tpu_custom_call.1} parent=11 // pred_check_branch
          %184 = sbr.rel (%p182) target = $region20
        $region19: #{tpu_custom_call.1} parent=11 // pred_region
          _
        $region20: #{tpu_custom_call.1} parent=11 // pred_fallthru
          _
        // Predicated region
        $region21: #{tpu_custom_call.1} parent=11 // pred_check
          %p185 = pneg %p107
        $region22: #{tpu_custom_call.1} parent=11 // pred_check_branch
          %187 = sbr.rel (%p185) target = $region24
        $region23: #{tpu_custom_call.1} parent=11 // pred_region
          %s189 = ssub.s32 256, 256
          %190 = vsyncadd [#allocation8], %s189
          %s191 = sshll.u32 [#allocation9], 4
          %s192 = int_to_ptr.vmem [resolvable:$true] %s191
          %197 = dma.hbm_to_vmem [thread:$0]  %s3, 256, %s192, [#allocation8], 64, 64, 4
        $region24: #{tpu_custom_call.1} parent=11 // pred_fallthru
          _
        // Predicated region
        $region25: #{tpu_custom_call.1} parent=11 // pred_check
          %p198 = pneg %p128
        $region26: #{tpu_custom_call.1} parent=11 // pred_check_branch
          %200 = sbr.rel (%p198) target = $region28
        $region27: #{tpu_custom_call.1} parent=11 // pred_region
          _
        $region28: #{tpu_custom_call.1} parent=11 // pred_fallthru
          _
      $region12: #{tpu_custom_call.1} parent=5 // pred_fallthru
        _
      %p201 = scmp.lt.s32.totalorder %s18, 2
      // Predicated region
      $region29: #{tpu_custom_call.1} parent=5 // pred_check
        %p202 = pneg %p201
      $region30: #{tpu_custom_call.1} parent=5 // pred_check_branch
        %204 = sbr.rel (%p202) target = $region32
      $region31: #{tpu_custom_call.1} parent=5 // pred_region
        // Predicated region
        $region33: #{tpu_custom_call.1} parent=31 // pred_check
          %p205 = pneg %p38
        $region34: #{tpu_custom_call.1} parent=31 // pred_check_branch
          %207 = sbr.rel (%p205) target = $region36
        $region35: #{tpu_custom_call.1} parent=31 // pred_region
          %s208 = sand.u32 %s28, 1
          %s209 = scalar_lea.sflag [#allocation5], %s208
          %s210 = sand.u32 %s28, 1
          %s211 = smul.addr %s210, 4
          %s212 = scalar_lea.vmem [#allocation4], %s211
          %s214 = ssub.s32 64, 64
          %215 = vsyncadd %s209, %s214
          %s216 = smul.addr %s18, 64
          %s217 = scalar_lea.hbm %s0, %s216
          %s219 = sshll.u32 %s212, 4
          %s220 = int_to_ptr.vmem [resolvable:$true] %s219
          %222 = dma.hbm_to_vmem [thread:$0]  %s217, 64, %s220, %s209
        $region36: #{tpu_custom_call.1} parent=31 // pred_fallthru
          _
      $region32: #{tpu_custom_call.1} parent=5 // pred_fallthru
        _
      %p223 = scmp.le.s32.totalorder 1, %s18
      %p224 = scmp.lt.s32.totalorder %s18, 3
      %p225 = pnand %p223, %p224
      %p226 = pneg %p225
      // Predicated region
      $region37: #{tpu_custom_call.1} parent=5 // pred_check
        _
      $region38: #{tpu_custom_call.1} parent=5 // pred_check_branch
        %228 = sbr.rel (%p225) target = $region40
      $region39: #{tpu_custom_call.1} parent=5 // pred_region
        %s229 = ssub.s32 %s18, 1
        %s230 = sand.u32 %s31, 1
        %s231 = scalar_lea.sflag [#allocation5], %s230
        %s232 = sand.u32 %s31, 1
        %s233 = smul.addr %s232, 4
        %s234 = scalar_lea.vmem [#allocation4], %s233
        // Predicated region
        $region41: #{tpu_custom_call.1} parent=39 // pred_check
          %p235 = pneg %p44
        $region42: #{tpu_custom_call.1} parent=39 // pred_check_branch
          %237 = sbr.rel (%p235) target = $region44
        $region43: #{tpu_custom_call.1} parent=39 // pred_region
          %238 = dma.done %s231, 64
        $region44: #{tpu_custom_call.1} parent=39 // pred_fallthru
          _
        // Predicated region
        $region45: #{tpu_custom_call.1} parent=39 // pred_check
          %p239 = pneg %p65
        $region46: #{tpu_custom_call.1} parent=39 // pred_check_branch
          %241 = sbr.rel (%p239) target = $region48
        $region47: #{tpu_custom_call.1} parent=39 // pred_region
          %242 = dma.done [#allocation8], 256
        $region48: #{tpu_custom_call.1} parent=39 // pred_fallthru
          _
        // Predicated region
        $region49: #{tpu_custom_call.1} parent=39 // pred_check
          %p243 = pneg %p107
        $region50: #{tpu_custom_call.1} parent=39 // pred_check_branch
          %245 = sbr.rel (%p243) target = $region52
        $region51: #{tpu_custom_call.1} parent=39 // pred_region
          %246 = dma.done [#allocation8], 256
        $region52: #{tpu_custom_call.1} parent=39 // pred_fallthru
          _
        %s247 = sand.u32 %s31, 1
        %s248 = scalar_lea.sflag [#allocation5], %s247
        %s249 = sand.u32 %s31, 1
        %s250 = smul.addr %s249, 4
        %s251 = scalar_lea.vmem [#allocation4], %s250
        %p252 = pneg %p44
        %p253 = pneg %p41
        %p254 = pneg %p65
        %p255 = pneg %p62
        %p256 = pneg %p86
        %p257 = pneg %p83
        %p258 = pneg %p107
        %p259 = pneg %p104
        %p260 = pneg %p128
        %p261 = pneg %p125
        %p262 = pneg %p154
        %p263 = pneg %p151
        %s264 = sand.u32 %s141, 1
        %s265 = scalar_lea.sflag [#allocation6], %s264
        %s266 = sand.u32 %s141, 1
        %s267 = smul.addr %s266, 8
        %s268 = scalar_lea.vmem [#allocation10], %s267
        %v270 = vld [vmem:[%s234] sm:$0xf]
        %v271 = vld [vmem:[#allocation7] sm:$0xf]
        %v272 = vld [vmem:[#allocation7 + $0x4] sm:$0xf]
        %v273 = vld [vmem:[#allocation7 + $0x8] sm:$0xf]
        %v274 = vld [vmem:[#allocation7 + $0xc] sm:$0xf]
        %v275 = vld [vmem:[%s2] sm:$0x1]
        %v277 = vlaneseq
        %v278 = vshrl.u32 %v277, 7
        %v279 = vsub.s32 0, %v278
        %v280 = vrot.slane %v275, %v279
        %v286 = vunpack.c.l.b16 %v271
        %v287 = vunpack.c.l.b16 %v272
        %v288 = vunpack.c.l.b16 %v273
        %v289 = vunpack.c.l.b16 %v274
        %v290 = vpack.c.b16 %v287, %v286
        %v291 = vpack.c.b16 %v289, %v288
        %vm294 = vcmask 261120
        %v296 = vsel %vm294, %v270, 0
        %298 = vmatprep.subr.bf16.mxu0 0
        %299 = vmatpush1.bf16.msra.mxu0 0
        %300 = vmatprep.subr.bf16.mxu0 0
        %301 = vmatpush1.bf16.msra.mxu0 0
        %302 = vmatprep.subr.bf16.mxu0 0
        %303 = vmatpush1.bf16.msra.mxu0 0
        %304 = vmatprep.subr.bf16.mxu0 0
        %305 = vmatpush1.bf16.msra.mxu0 0
        %306 = vmatprep.subr.bf16.mxu0 0
        %307 = vmatpush1.bf16.msra.mxu0 0
        %308 = vmatprep.subr.bf16.mxu0 0
        %309 = vmatpush1.bf16.msra.mxu0 0
        %310 = vmatprep.subr.bf16.mxu0 0
        %311 = vmatpush1.bf16.msra.mxu0 %v291
        %312 = vmatprep.subr.bf16.mxu0 0
        %313 = vmatpush1.bf16.msra.mxu0 %v290
        %314 = vmatprep.subr.bf16.mxu0 0
        %315 = vmatpush2.bf16.msra.mxu0 0
        %316 = vmatprep.subr.bf16.mxu0 0
        %317 = vmatpush2.bf16.msra.mxu0 0
        %318 = vmatprep.subr.bf16.mxu0 0
        %319 = vmatpush2.bf16.msra.mxu0 0
        %320 = vmatprep.subr.bf16.mxu0 0
        %321 = vmatpush2.bf16.msra.mxu0 0
        %322 = vmatprep.subr.bf16.mxu0 0
        %323 = vmatpush2.bf16.msra.mxu0 0
        %324 = vmatprep.subr.bf16.mxu0 0
        %325 = vmatpush2.bf16.msra.mxu0 0
        %326 = vmatprep.subr.bf16.mxu0 0
        %327 = vmatpush2.bf16.msra.mxu0 0
        %328 = vmatprep.subr.bf16.mxu0 0
        %329 = vmatpush2.bf16.msra.mxu0 0
        %330 = vmatprep.mubr.bf16.mxu0 0
        %331 = vmatmul.mubr.bf16.gmra.mxu0 %v296
        %v332 = vpop.f32.mrf.mxu0
        %v333 = vadd.f32 %v280, %v332
        %v334 = vpop.f32.mrf.mxu0
        %v335 = vpop.f32.mrf.mxu0
        %v336 = vpop.f32.mrf.mxu0
        %337 = vdwg.mxu0
        %v338 = vpack.c.bf16 %v333, %v333
        %vm339 = vcmask 781312
        %340 = vst.msk [vmem:[#allocation2] sm:$0xf] %vm339, %v338
        %v341 = vld [vmem:[#allocation2] sm:$0xf]
        %v343 = vunpack.c.l.b16 %v341
        %v344 = vpack.c.b16 %v343, %v343
        %345 = vrot.lane.b32.xlu0 %v344, 96
        %v346 = vpop.permute.xlu0 %345
        %vm347 = vcmask 64512
        %v349 = vsel %vm347, %v341, 0
        %v352 = vsel %vm347, %v346, 0
        %354 = vmatprep.subr.bf16.mxu0 0
        %355 = vmatpush1.bf16.xpose.msra.mxu0 0
        %356 = vmatprep.subr.bf16.mxu0 0
        %357 = vmatpush1.bf16.xpose.msra.mxu0 0
        %358 = vmatprep.subr.bf16.mxu0 0
        %359 = vmatpush1.bf16.xpose.msra.mxu0 0
        %360 = vmatprep.subr.bf16.mxu0 0
        %361 = vmatpush1.bf16.xpose.msra.mxu0 0
        %362 = vmatprep.subr.bf16.mxu0 0
        %363 = vmatpush1.bf16.xpose.msra.mxu0 0
        %364 = vmatprep.subr.bf16.mxu0 0
        %365 = vmatpush1.bf16.xpose.msra.mxu0 0
        %366 = vmatprep.subr.bf16.mxu0 0
        %367 = vmatpush1.bf16.xpose.msra.mxu0 0
        %368 = vmatprep.subr.bf16.mxu0 0
        %369 = vmatpush1.bf16.xpose.msra.mxu0 %v352
        %370 = vmatprep.subr.bf16.mxu0 0
        %371 = vmatpush2.bf16.xpose.msra.mxu0 0
        %372 = vmatprep.subr.bf16.mxu0 0
        %373 = vmatpush2.bf16.xpose.msra.mxu0 0
        %374 = vmatprep.subr.bf16.mxu0 0
        %375 = vmatpush2.bf16.xpose.msra.mxu0 0
        %376 = vmatprep.subr.bf16.mxu0 0
        %377 = vmatpush2.bf16.xpose.msra.mxu0 0
        %378 = vmatprep.subr.bf16.mxu0 0
        %379 = vmatpush2.bf16.xpose.msra.mxu0 0
        %380 = vmatprep.subr.bf16.mxu0 0
        %381 = vmatpush2.bf16.xpose.msra.mxu0 0
        %382 = vmatprep.subr.bf16.mxu0 0
        %383 = vmatpush2.bf16.xpose.msra.mxu0 0
        %384 = vmatprep.subr.bf16.mxu0 0
        %385 = vmatpush2.bf16.xpose.msra.mxu0 0
        %386 = vmatprep.mubr.bf16.mxu0 0
        %387 = vmatmul.mubr.bf16.gmra.mxu0 %v349
        %v388 = vpop.f32.mrf.mxu0
        %v389 = vadd.f32 0.0, %v388
        %v390 = vpop.f32.mrf.mxu0
        %v391 = vpop.f32.mrf.mxu0
        %v392 = vpop.f32.mrf.mxu0
        %393 = vdwg.mxu0
        %v394 = vsel %vm347, %v389, -inf
        %395 = vmax.xlane.f32.xlu0 %v394
        %v396 = vpop.xlane.xlu0 %395
        %v397 = vsub.f32 %v389, %v396
        %v398 = vmul.f32 %v397, 1.442695
        %v399 = vpow.pop %v398
        %v400 = vsel %vm347, %v399, 0.0
        %401 = vadd.xlane.f32.xlu0 %v400
        %v402 = vpop.xlane.xlu0 %401
        %v403 = vrcp.pop %v402
        %v404 = vmul.f32 %v399, %v403
        %v405 = vpack.c.bf16 %v404, %v404
        %406 = vrot.lane.b32.xlu0 %v344, 64
        %v407 = vpop.permute.xlu0 %406
        %v409 = vsel %vm347, %v405, 0
        %vm411 = vcmask 1043456
        %v413 = vsel %vm411, %v407, 0
        %415 = vmatprep.subr.bf16.mxu0 0
        %416 = vmatpush1.bf16.msra.mxu0 0
        %417 = vmatprep.subr.bf16.mxu0 0
        %418 = vmatpush1.bf16.msra.mxu0 0
        %419 = vmatprep.subr.bf16.mxu0 0
        %420 = vmatpush1.bf16.msra.mxu0 0
        %421 = vmatprep.subr.bf16.mxu0 0
        %422 = vmatpush1.bf16.msra.mxu0 0
        %423 = vmatprep.subr.bf16.mxu0 0
        %424 = vmatpush1.bf16.msra.mxu0 0
        %425 = vmatprep.subr.bf16.mxu0 0
        %426 = vmatpush1.bf16.msra.mxu0 0
        %427 = vmatprep.subr.bf16.mxu0 0
        %428 = vmatpush1.bf16.msra.mxu0 0
        %429 = vmatprep.subr.bf16.mxu0 0
        %430 = vmatpush1.bf16.msra.mxu0 %v413
        %431 = vmatprep.subr.bf16.mxu0 0
        %432 = vmatpush2.bf16.msra.mxu0 0
        %433 = vmatprep.subr.bf16.mxu0 0
        %434 = vmatpush2.bf16.msra.mxu0 0
        %435 = vmatprep.subr.bf16.mxu0 0
        %436 = vmatpush2.bf16.msra.mxu0 0
        %437 = vmatprep.subr.bf16.mxu0 0
        %438 = vmatpush2.bf16.msra.mxu0 0
        %439 = vmatprep.subr.bf16.mxu0 0
        %440 = vmatpush2.bf16.msra.mxu0 0
        %441 = vmatprep.subr.bf16.mxu0 0
        %442 = vmatpush2.bf16.msra.mxu0 0
        %443 = vmatprep.subr.bf16.mxu0 0
        %444 = vmatpush2.bf16.msra.mxu0 0
        %445 = vmatprep.subr.bf16.mxu0 0
        %446 = vmatpush2.bf16.msra.mxu0 0
        %447 = vmatprep.mubr.bf16.mxu0 0
        %448 = vmatmul.mubr.bf16.gmra.mxu0 %v409
        %v449 = vpop.f32.mrf.mxu0
        %v450 = vadd.f32 0.0, %v449
        %v451 = vpop.f32.mrf.mxu0
        %v452 = vpop.f32.mrf.mxu0
        %v453 = vpop.f32.mrf.mxu0
        %454 = vdwg.mxu0
        %v455 = vpack.c.bf16 %v450, %v450
        %vm456 = vcmask 60416
        %457 = vst.msk [vmem:[#allocation3] sm:$0xf] %vm456, %v455
        %v458 = vld [vmem:[#allocation2] sm:$0xf]
        %v460 = vunpack.c.l.b16 %v458
        %v461 = vpack.c.b16 %v460, %v460
        %462 = vrot.lane.b32.xlu0 %v461, 120
        %v463 = vpop.permute.xlu0 %462
        %464 = vrot.lane.b32.xlu0 %v461, 88
        %v465 = vpop.permute.xlu0 %464
        %v467 = vsel %vm347, %v463, 0
        %v470 = vsel %vm347, %v465, 0
        %472 = vmatprep.subr.bf16.mxu0 0
        %473 = vmatpush1.bf16.xpose.msra.mxu0 0
        %474 = vmatprep.subr.bf16.mxu0 0
        %475 = vmatpush1.bf16.xpose.msra.mxu0 0
        %476 = vmatprep.subr.bf16.mxu0 0
        %477 = vmatpush1.bf16.xpose.msra.mxu0 0
        %478 = vmatprep.subr.bf16.mxu0 0
        %479 = vmatpush1.bf16.xpose.msra.mxu0 0
        %480 = vmatprep.subr.bf16.mxu0 0
        %481 = vmatpush1.bf16.xpose.msra.mxu0 0
        %482 = vmatprep.subr.bf16.mxu0 0
        %483 = vmatpush1.bf16.xpose.msra.mxu0 0
        %484 = vmatprep.subr.bf16.mxu0 0
        %485 = vmatpush1.bf16.xpose.msra.mxu0 0
        %486 = vmatprep.subr.bf16.mxu0 0
        %487 = vmatpush1.bf16.xpose.msra.mxu0 %v470
        %488 = vmatprep.subr.bf16.mxu0 0
        %489 = vmatpush2.bf16.xpose.msra.mxu0 0
        %490 = vmatprep.subr.bf16.mxu0 0
        %491 = vmatpush2.bf16.xpose.msra.mxu0 0
        %492 = vmatprep.subr.bf16.mxu0 0
        %493 = vmatpush2.bf16.xpose.msra.mxu0 0
        %494 = vmatprep.subr.bf16.mxu0 0
        %495 = vmatpush2.bf16.xpose.msra.mxu0 0
        %496 = vmatprep.subr.bf16.mxu0 0
        %497 = vmatpush2.bf16.xpose.msra.mxu0 0
        %498 = vmatprep.subr.bf16.mxu0 0
        %499 = vmatpush2.bf16.xpose.msra.mxu0 0
        %500 = vmatprep.subr.bf16.mxu0 0
        %501 = vmatpush2.bf16.xpose.msra.mxu0 0
        %502 = vmatprep.subr.bf16.mxu0 0
        %503 = vmatpush2.bf16.xpose.msra.mxu0 0
        %504 = vmatprep.mubr.bf16.mxu0 0
        %505 = vmatmul.mubr.bf16.gmra.mxu0 %v467
        %v506 = vpop.f32.mrf.mxu0
        %v507 = vadd.f32 0.0, %v506
        %v508 = vpop.f32.mrf.mxu0
        %v509 = vpop.f32.mrf.mxu0
        %v510 = vpop.f32.mrf.mxu0
        %511 = vdwg.mxu0
        %v512 = vsel %vm347, %v507, -inf
        %513 = vmax.xlane.f32.xlu0 %v512
        %v514 = vpop.xlane.xlu0 %513
        %v515 = vsub.f32 %v507, %v514
        %v516 = vmul.f32 %v515, 1.442695
        %v517 = vpow.pop %v516
        %v518 = vsel %vm347, %v517, 0.0
        %519 = vadd.xlane.f32.xlu0 %v518
        %v520 = vpop.xlane.xlu0 %519
        %v521 = vrcp.pop %v520
        %v522 = vmul.f32 %v517, %v521
        %v523 = vpack.c.bf16 %v522, %v522
        %524 = vrot.lane.b32.xlu0 %v461, 56
        %v525 = vpop.permute.xlu0 %524
        %v527 = vsel %vm347, %v523, 0
        %v530 = vsel %vm411, %v525, 0
        %532 = vmatprep.subr.bf16.mxu0 0
        %533 = vmatpush1.bf16.msra.mxu0 0
        %534 = vmatprep.subr.bf16.mxu0 0
        %535 = vmatpush1.bf16.msra.mxu0 0
        %536 = vmatprep.subr.bf16.mxu0 0
        %537 = vmatpush1.bf16.msra.mxu0 0
        %538 = vmatprep.subr.bf16.mxu0 0
        %539 = vmatpush1.bf16.msra.mxu0 0
        %540 = vmatprep.subr.bf16.mxu0 0
        %541 = vmatpush1.bf16.msra.mxu0 0
        %542 = vmatprep.subr.bf16.mxu0 0
        %543 = vmatpush1.bf16.msra.mxu0 0
        %544 = vmatprep.subr.bf16.mxu0 0
        %545 = vmatpush1.bf16.msra.mxu0 0
        %546 = vmatprep.subr.bf16.mxu0 0
        %547 = vmatpush1.bf16.msra.mxu0 %v530
        %548 = vmatprep.subr.bf16.mxu0 0
        %549 = vmatpush2.bf16.msra.mxu0 0
        %550 = vmatprep.subr.bf16.mxu0 0
        %551 = vmatpush2.bf16.msra.mxu0 0
        %552 = vmatprep.subr.bf16.mxu0 0
        %553 = vmatpush2.bf16.msra.mxu0 0
        %554 = vmatprep.subr.bf16.mxu0 0
        %555 = vmatpush2.bf16.msra.mxu0 0
        %556 = vmatprep.subr.bf16.mxu0 0
        %557 = vmatpush2.bf16.msra.mxu0 0
        %558 = vmatprep.subr.bf16.mxu0 0
        %559 = vmatpush2.bf16.msra.mxu0 0
        %560 = vmatprep.subr.bf16.mxu0 0
        %561 = vmatpush2.bf16.msra.mxu0 0
        %562 = vmatprep.subr.bf16.mxu0 0
        %563 = vmatpush2.bf16.msra.mxu0 0
        %564 = vmatprep.mubr.bf16.mxu0 0
        %565 = vmatmul.mubr.bf16.gmra.mxu0 %v527
        %v566 = vpop.f32.mrf.mxu0
        %v567 = vadd.f32 0.0, %v566
        %v568 = vpop.f32.mrf.mxu0
        %v569 = vpop.f32.mrf.mxu0
        %v570 = vpop.f32.mrf.mxu0
        %571 = vdwg.mxu0
        %v572 = vpack.c.bf16 %v567, %v567
        %v574 = vunpack.c.l.b16 %v572
        %v575 = vpack.c.b16 %v574, %v574
        %576 = vrot.lane.b32.xlu0 %v575, 8
        %v577 = vpop.permute.xlu0 %576
        %vm579 = vcmask 126016
        %580 = vst.msk [vmem:[#allocation3] sm:$0xf] %vm579, %v577
        %v581 = vld [vmem:[#allocation2] sm:$0xf]
        %v583 = vunpack.c.l.b16 %v581
        %v584 = vpack.c.b16 %v583, %v583
        %585 = vrot.lane.b32.xlu0 %v584, 112
        %v586 = vpop.permute.xlu0 %585
        %587 = vrot.lane.b32.xlu0 %v584, 80
        %v588 = vpop.permute.xlu0 %587
        %v590 = vsel %vm347, %v586, 0
        %v593 = vsel %vm347, %v588, 0
        %595 = vmatprep.subr.bf16.mxu0 0
        %596 = vmatpush1.bf16.xpose.msra.mxu0 0
        %597 = vmatprep.subr.bf16.mxu0 0
        %598 = vmatpush1.bf16.xpose.msra.mxu0 0
        %599 = vmatprep.subr.bf16.mxu0 0
        %600 = vmatpush1.bf16.xpose.msra.mxu0 0
        %601 = vmatprep.subr.bf16.mxu0 0
        %602 = vmatpush1.bf16.xpose.msra.mxu0 0
        %603 = vmatprep.subr.bf16.mxu0 0
        %604 = vmatpush1.bf16.xpose.msra.mxu0 0
        %605 = vmatprep.subr.bf16.mxu0 0
        %606 = vmatpush1.bf16.xpose.msra.mxu0 0
        %607 = vmatprep.subr.bf16.mxu0 0
        %608 = vmatpush1.bf16.xpose.msra.mxu0 0
        %609 = vmatprep.subr.bf16.mxu0 0
        %610 = vmatpush1.bf16.xpose.msra.mxu0 %v593
        %611 = vmatprep.subr.bf16.mxu0 0
        %612 = vmatpush2.bf16.xpose.msra.mxu0 0
        %613 = vmatprep.subr.bf16.mxu0 0
        %614 = vmatpush2.bf16.xpose.msra.mxu0 0
        %615 = vmatprep.subr.bf16.mxu0 0
        %616 = vmatpush2.bf16.xpose.msra.mxu0 0
        %617 = vmatprep.subr.bf16.mxu0 0
        %618 = vmatpush2.bf16.xpose.msra.mxu0 0
        %619 = vmatprep.subr.bf16.mxu0 0
        %620 = vmatpush2.bf16.xpose.msra.mxu0 0
        %621 = vmatprep.subr.bf16.mxu0 0
        %622 = vmatpush2.bf16.xpose.msra.mxu0 0
        %623 = vmatprep.subr.bf16.mxu0 0
        %624 = vmatpush2.bf16.xpose.msra.mxu0 0
        %625 = vmatprep.subr.bf16.mxu0 0
        %626 = vmatpush2.bf16.xpose.msra.mxu0 0
        %627 = vmatprep.mubr.bf16.mxu0 0
        %628 = vmatmul.mubr.bf16.gmra.mxu0 %v590
        %v629 = vpop.f32.mrf.mxu0
        %v630 = vadd.f32 0.0, %v629
        %v631 = vpop.f32.mrf.mxu0
        %v632 = vpop.f32.mrf.mxu0
        %v633 = vpop.f32.mrf.mxu0
        %634 = vdwg.mxu0
        %v635 = vsel %vm347, %v630, -inf
        %636 = vmax.xlane.f32.xlu0 %v635
        %v637 = vpop.xlane.xlu0 %636
        %v638 = vsub.f32 %v630, %v637
        %v639 = vmul.f32 %v638, 1.442695
        %v640 = vpow.pop %v639
        %v641 = vsel %vm347, %v640, 0.0
        %642 = vadd.xlane.f32.xlu0 %v641
        %v643 = vpop.xlane.xlu0 %642
        %v644 = vrcp.pop %v643
        %v645 = vmul.f32 %v640, %v644
        %v646 = vpack.c.bf16 %v645, %v645
        %647 = vrot.lane.b32.xlu0 %v584, 48
        %v648 = vpop.permute.xlu0 %647
        %v650 = vsel %vm347, %v646, 0
        %v653 = vsel %vm411, %v648, 0
        %655 = vmatprep.subr.bf16.mxu0 0
        %656 = vmatpush1.bf16.msra.mxu0 0
        %657 = vmatprep.subr.bf16.mxu0 0
        %658 = vmatpush1.bf16.msra.mxu0 0
        %659 = vmatprep.subr.bf16.mxu0 0
        %660 = vmatpush1.bf16.msra.mxu0 0
        %661 = vmatprep.subr.bf16.mxu0 0
        %662 = vmatpush1.bf16.msra.mxu0 0
        %663 = vmatprep.subr.bf16.mxu0 0
        %664 = vmatpush1.bf16.msra.mxu0 0
        %665 = vmatprep.subr.bf16.mxu0 0
        %666 = vmatpush1.bf16.msra.mxu0 0
        %667 = vmatprep.subr.bf16.mxu0 0
        %668 = vmatpush1.bf16.msra.mxu0 0
        %669 = vmatprep.subr.bf16.mxu0 0
        %670 = vmatpush1.bf16.msra.mxu0 %v653
        %671 = vmatprep.subr.bf16.mxu0 0
        %672 = vmatpush2.bf16.msra.mxu0 0
        %673 = vmatprep.subr.bf16.mxu0 0
        %674 = vmatpush2.bf16.msra.mxu0 0
        %675 = vmatprep.subr.bf16.mxu0 0
        %676 = vmatpush2.bf16.msra.mxu0 0
        %677 = vmatprep.subr.bf16.mxu0 0
        %678 = vmatpush2.bf16.msra.mxu0 0
        %679 = vmatprep.subr.bf16.mxu0 0
        %680 = vmatpush2.bf16.msra.mxu0 0
        %681 = vmatprep.subr.bf16.mxu0 0
        %682 = vmatpush2.bf16.msra.mxu0 0
        %683 = vmatprep.subr.bf16.mxu0 0
        %684 = vmatpush2.bf16.msra.mxu0 0
        %685 = vmatprep.subr.bf16.mxu0 0
        %686 = vmatpush2.bf16.msra.mxu0 0
        %687 = vmatprep.mubr.bf16.mxu0 0
        %688 = vmatmul.mubr.bf16.gmra.mxu0 %v650
        %v689 = vpop.f32.mrf.mxu0
        %v690 = vadd.f32 0.0, %v689
        %v691 = vpop.f32.mrf.mxu0
        %v692 = vpop.f32.mrf.mxu0
        %v693 = vpop.f32.mrf.mxu0
        %694 = vdwg.mxu0
        %v695 = vpack.c.bf16 %v690, %v690
        %v697 = vunpack.c.l.b16 %v695
        %v698 = vpack.c.b16 %v697, %v697
        %699 = vrot.lane.b32.xlu0 %v698, 16
        %v700 = vpop.permute.xlu0 %699
        %vm702 = vcmask 191616
        %703 = vst.msk [vmem:[#allocation3] sm:$0xf] %vm702, %v700
        %v704 = vld [vmem:[#allocation2] sm:$0xf]
        %v706 = vunpack.c.l.b16 %v704
        %v707 = vpack.c.b16 %v706, %v706
        %708 = vrot.lane.b32.xlu0 %v707, 104
        %v709 = vpop.permute.xlu0 %708
        %710 = vrot.lane.b32.xlu0 %v707, 72
        %v711 = vpop.permute.xlu0 %710
        %v713 = vsel %vm347, %v709, 0
        %v716 = vsel %vm347, %v711, 0
        %718 = vmatprep.subr.bf16.mxu0 0
        %719 = vmatpush1.bf16.xpose.msra.mxu0 0
        %720 = vmatprep.subr.bf16.mxu0 0
        %721 = vmatpush1.bf16.xpose.msra.mxu0 0
        %722 = vmatprep.subr.bf16.mxu0 0
        %723 = vmatpush1.bf16.xpose.msra.mxu0 0
        %724 = vmatprep.subr.bf16.mxu0 0
        %725 = vmatpush1.bf16.xpose.msra.mxu0 0
        %726 = vmatprep.subr.bf16.mxu0 0
        %727 = vmatpush1.bf16.xpose.msra.mxu0 0
        %728 = vmatprep.subr.bf16.mxu0 0
        %729 = vmatpush1.bf16.xpose.msra.mxu0 0
        %730 = vmatprep.subr.bf16.mxu0 0
        %731 = vmatpush1.bf16.xpose.msra.mxu0 0
        %732 = vmatprep.subr.bf16.mxu0 0
        %733 = vmatpush1.bf16.xpose.msra.mxu0 %v716
        %734 = vmatprep.subr.bf16.mxu0 0
        %735 = vmatpush2.bf16.xpose.msra.mxu0 0
        %736 = vmatprep.subr.bf16.mxu0 0
        %737 = vmatpush2.bf16.xpose.msra.mxu0 0
        %738 = vmatprep.subr.bf16.mxu0 0
        %739 = vmatpush2.bf16.xpose.msra.mxu0 0
        %740 = vmatprep.subr.bf16.mxu0 0
        %741 = vmatpush2.bf16.xpose.msra.mxu0 0
        %742 = vmatprep.subr.bf16.mxu0 0
        %743 = vmatpush2.bf16.xpose.msra.mxu0 0
        %744 = vmatprep.subr.bf16.mxu0 0
        %745 = vmatpush2.bf16.xpose.msra.mxu0 0
        %746 = vmatprep.subr.bf16.mxu0 0
        %747 = vmatpush2.bf16.xpose.msra.mxu0 0
        %748 = vmatprep.subr.bf16.mxu0 0
        %749 = vmatpush2.bf16.xpose.msra.mxu0 0
        %750 = vmatprep.mubr.bf16.mxu0 0
        %751 = vmatmul.mubr.bf16.gmra.mxu0 %v713
        %v752 = vpop.f32.mrf.mxu0
        %v753 = vadd.f32 0.0, %v752
        %v754 = vpop.f32.mrf.mxu0
        %v755 = vpop.f32.mrf.mxu0
        %v756 = vpop.f32.mrf.mxu0
        %757 = vdwg.mxu0
        %v758 = vsel %vm347, %v753, -inf
        %759 = vmax.xlane.f32.xlu0 %v758
        %v760 = vpop.xlane.xlu0 %759
        %v761 = vsub.f32 %v753, %v760
        %v762 = vmul.f32 %v761, 1.442695
        %v763 = vpow.pop %v762
        %v764 = vsel %vm347, %v763, 0.0
        %765 = vadd.xlane.f32.xlu0 %v764
        %v766 = vpop.xlane.xlu0 %765
        %v767 = vrcp.pop %v766
        %v768 = vmul.f32 %v763, %v767
        %v769 = vpack.c.bf16 %v768, %v768
        %770 = vrot.lane.b32.xlu0 %v707, 40
        %v771 = vpop.permute.xlu0 %770
        %v773 = vsel %vm347, %v769, 0
        %v776 = vsel %vm411, %v771, 0
        %778 = vmatprep.subr.bf16.mxu0 0
        %779 = vmatpush1.bf16.msra.mxu0 0
        %780 = vmatprep.subr.bf16.mxu0 0
        %781 = vmatpush1.bf16.msra.mxu0 0
        %782 = vmatprep.subr.bf16.mxu0 0
        %783 = vmatpush1.bf16.msra.mxu0 0
        %784 = vmatprep.subr.bf16.mxu0 0
        %785 = vmatpush1.bf16.msra.mxu0 0
        %786 = vmatprep.subr.bf16.mxu0 0
        %787 = vmatpush1.bf16.msra.mxu0 0
        %788 = vmatprep.subr.bf16.mxu0 0
        %789 = vmatpush1.bf16.msra.mxu0 0
        %790 = vmatprep.subr.bf16.mxu0 0
        %791 = vmatpush1.bf16.msra.mxu0 0
        %792 = vmatprep.subr.bf16.mxu0 0
        %793 = vmatpush1.bf16.msra.mxu0 %v776
        %794 = vmatprep.subr.bf16.mxu0 0
        %795 = vmatpush2.bf16.msra.mxu0 0
        %796 = vmatprep.subr.bf16.mxu0 0
        %797 = vmatpush2.bf16.msra.mxu0 0
        %798 = vmatprep.subr.bf16.mxu0 0
        %799 = vmatpush2.bf16.msra.mxu0 0
        %800 = vmatprep.subr.bf16.mxu0 0
        %801 = vmatpush2.bf16.msra.mxu0 0
        %802 = vmatprep.subr.bf16.mxu0 0
        %803 = vmatpush2.bf16.msra.mxu0 0
        %804 = vmatprep.subr.bf16.mxu0 0
        %805 = vmatpush2.bf16.msra.mxu0 0
        %806 = vmatprep.subr.bf16.mxu0 0
        %807 = vmatpush2.bf16.msra.mxu0 0
        %808 = vmatprep.subr.bf16.mxu0 0
        %809 = vmatpush2.bf16.msra.mxu0 0
        %810 = vmatprep.mubr.bf16.mxu0 0
        %811 = vmatmul.mubr.bf16.gmra.mxu0 %v773
        %v812 = vpop.f32.mrf.mxu0
        %v813 = vadd.f32 0.0, %v812
        %v814 = vpop.f32.mrf.mxu0
        %v815 = vpop.f32.mrf.mxu0
        %v816 = vpop.f32.mrf.mxu0
        %817 = vdwg.mxu0
        %v818 = vpack.c.bf16 %v813, %v813
        %v820 = vunpack.c.l.b16 %v818
        %v821 = vpack.c.b16 %v820, %v820
        %822 = vrot.lane.b32.xlu0 %v821, 24
        %v823 = vpop.permute.xlu0 %822
        %vm825 = vcmask 257216
        %826 = vst.msk [vmem:[#allocation3] sm:$0xf] %vm825, %v823
        %v827 = vld [vmem:[#allocation3] sm:$0xf]
        %v828 = vld [vmem:[#allocation9] sm:$0xf]
        %v829 = vld [vmem:[#allocation9 + $0x4] sm:$0xf]
        %v830 = vld [vmem:[#allocation9 + $0x8] sm:$0xf]
        %v831 = vld [vmem:[#allocation9 + $0xc] sm:$0xf]
        %v832 = vld [vmem:[%s4] sm:$0x1]
        %v834 = vlaneseq
        %v835 = vshrl.u32 %v834, 7
        %v836 = vsub.s32 0, %v835
        %v837 = vrot.slane %v832, %v836
        %v843 = vunpack.c.l.b16 %v828
        %v844 = vunpack.c.l.b16 %v829
        %v845 = vunpack.c.l.b16 %v830
        %v846 = vunpack.c.l.b16 %v831
        %v847 = vpack.c.b16 %v844, %v843
        %v848 = vpack.c.b16 %v846, %v845
        %v852 = vsel %vm294, %v827, 0
        %854 = vmatprep.subr.bf16.mxu0 0
        %855 = vmatpush1.bf16.msra.mxu0 0
        %856 = vmatprep.subr.bf16.mxu0 0
        %857 = vmatpush1.bf16.msra.mxu0 0
        %858 = vmatprep.subr.bf16.mxu0 0
        %859 = vmatpush1.bf16.msra.mxu0 0
        %860 = vmatprep.subr.bf16.mxu0 0
        %861 = vmatpush1.bf16.msra.mxu0 0
        %862 = vmatprep.subr.bf16.mxu0 0
        %863 = vmatpush1.bf16.msra.mxu0 0
        %864 = vmatprep.subr.bf16.mxu0 0
        %865 = vmatpush1.bf16.msra.mxu0 0
        %866 = vmatprep.subr.bf16.mxu0 0
        %867 = vmatpush1.bf16.msra.mxu0 %v848
        %868 = vmatprep.subr.bf16.mxu0 0
        %869 = vmatpush1.bf16.msra.mxu0 %v847
        %870 = vmatprep.subr.bf16.mxu0 0
        %871 = vmatpush2.bf16.msra.mxu0 0
        %872 = vmatprep.subr.bf16.mxu0 0
        %873 = vmatpush2.bf16.msra.mxu0 0
        %874 = vmatprep.subr.bf16.mxu0 0
        %875 = vmatpush2.bf16.msra.mxu0 0
        %876 = vmatprep.subr.bf16.mxu0 0
        %877 = vmatpush2.bf16.msra.mxu0 0
        %878 = vmatprep.subr.bf16.mxu0 0
        %879 = vmatpush2.bf16.msra.mxu0 0
        %880 = vmatprep.subr.bf16.mxu0 0
        %881 = vmatpush2.bf16.msra.mxu0 0
        %882 = vmatprep.subr.bf16.mxu0 0
        %883 = vmatpush2.bf16.msra.mxu0 0
        %884 = vmatprep.subr.bf16.mxu0 0
        %885 = vmatpush2.bf16.msra.mxu0 0
        %886 = vmatprep.mubr.bf16.mxu0 0
        %887 = vmatmul.mubr.bf16.gmra.mxu0 %v852
        %v888 = vpop.f32.mrf.mxu0
        %v889 = vadd.f32 %v837, %v888
        %v890 = vpop.f32.mrf.mxu0
        %v891 = vpop.f32.mrf.mxu0
        %v892 = vpop.f32.mrf.mxu0
        %893 = vdwg.mxu0
        %894 = vst.msk [vmem:[%s268] sm:$0xff] %vm294, %v889
        %s895 = sand.u32 %s141, 1
        %s896 = scalar_lea.sflag [#allocation6], %s895
        %s897 = sand.u32 %s141, 1
        %s898 = smul.addr %s897, 8
        %s899 = scalar_lea.vmem [#allocation10], %s898
        // Predicated region
        $region53: #{tpu_custom_call.1} parent=39 // pred_check
          %p900 = pneg %p151
        $region54: #{tpu_custom_call.1} parent=39 // pred_check_branch
          %902 = sbr.rel (%p900) target = $region56
        $region55: #{tpu_custom_call.1} parent=39 // pred_region
          %s904 = ssub.s32 128, 128
          %905 = vsyncadd %s896, %s904
          %s906 = smul.addr %s23, 128
          %s907 = scalar_lea.hbm %s5, %s906
          %s909 = sshll.u32 %s899, 4
          %s910 = int_to_ptr.vmem [resolvable:$true] %s909
          %912 = dma.vmem_to_hbm [thread:$0]  %s910, 128, %s907, %s896
        $region56: #{tpu_custom_call.1} parent=39 // pred_fallthru
          _
      $region40: #{tpu_custom_call.1} parent=5 // pred_fallthru
        _
      %p913 = scmp.le.s32.totalorder 2, %s18
      // Predicated region
      $region57: #{tpu_custom_call.1} parent=5 // pred_check
        %p914 = pneg %p913
      $region58: #{tpu_custom_call.1} parent=5 // pred_check_branch
        %916 = sbr.rel (%p914) target = $region60
      $region59: #{tpu_custom_call.1} parent=5 // pred_region
        %s917 = ssub.s32 %s18, 2
        // Predicated region
        $region61: #{tpu_custom_call.1} parent=59 // pred_check
          %p918 = pneg %p157
        $region62: #{tpu_custom_call.1} parent=59 // pred_check_branch
          %920 = sbr.rel (%p918) target = $region64
        $region63: #{tpu_custom_call.1} parent=59 // pred_region
          %s921 = sand.u32 %s142, 1
          %s922 = scalar_lea.sflag [#allocation6], %s921
          %s923 = sand.u32 %s142, 1
          %s924 = smul.addr %s923, 8
          %s925 = scalar_lea.vmem [#allocation10], %s924
          %926 = dma.done %s922, 128
        $region64: #{tpu_custom_call.1} parent=59 // pred_fallthru
          _
      $region60: #{tpu_custom_call.1} parent=5 // pred_fallthru
        _
    $region6: #{tpu_custom_call.1} parent=1 // loop_footer
      %s22 = sadd.s32 1, %s18
    $region7: #{tpu_custom_call.1} parent=1 // loop_footer_branch
      %17 = sbr.rel target = $region3
    $region8: #{tpu_custom_call.1} parent=1 // loop_exit
      _
    %927 = vsyncpa [#allocation5], 1
    %s928 = scalar_lea.sflag [#allocation5], 1
    %929 = vsyncpa %s928, 1
    %930 = vsyncpa [#allocation8], 1
    %931 = vsyncpa [#allocation6], 1
    %s932 = scalar_lea.sflag [#allocation6], 1
    %933 = vsyncpa %s932, 1

</llo_original>
